<compile_context>
chip_gen: v7x
topology: tpu7x:2x2x1
jax: 0.10.0
libtpu: 0.0.40
codegen_flags: <defaults>
</compile_context>

<pallas_src>
import jax
import jax.numpy as jnp
from jax.experimental import pallas as pl
from jax.experimental.pallas import tpu as pltpu


def logreg_kernel(x_ref, w_ref, b_ref, o_ref):
    # x_ref: (TB, F_pad) VMEM tile of the input (streamed, double-buffered)
    # w_ref: (1, F_pad)  VMEM lane-dense weight row (broadcasts over TB rows)
    # b_ref: (1, 1)      SMEM scalar bias
    # o_ref: (TB, 1)     VMEM output tile
    x = x_ref[...].astype(jnp.float32)
    w = w_ref[...].astype(jnp.float32)
    # VPU elementwise multiply + XLU lane reduction; both units have slack in a
    # memory-bound kernel, MXU stays out of the picture.
    z = jnp.sum(x * w, axis=-1, keepdims=True) + b_ref[0, 0]
    # sigmoid lowers to EUP (free bundle slot).
    o_ref[...] = jax.nn.sigmoid(z).astype(o_ref.dtype)


def _round_up(v, m):
    return (v + m - 1) // m * m


def logistic_regression(x, weight, bias, *, vmem_limit_bytes=32 * 1024 * 1024):
    """sigmoid(x @ weight.T + bias).

    x: (B, F); weight: (1, F) (PyTorch nn.Linear layout); bias: (1,).
    Returns (B, 1) in x.dtype.
    """
    B, F = x.shape
    itemsize = jnp.dtype(x.dtype).itemsize

    # Pad features to full 128-lane vregs; zero padding leaves the dot unchanged.
    F_pad = _round_up(max(F, 1), 128)

    # Batch tile: as large as a ~16 MiB double-buffer budget for x allows,
    # capped at 1024 rows, multiple of 8, and no larger than the (8-rounded) batch.
    budget = 16 * 1024 * 1024
    tb = min(1024, max(8, (budget // (2 * F_pad * itemsize)) // 8 * 8))
    tb = min(tb, _round_up(B, 8))
    B_pad = _round_up(B, tb)

    xp = jnp.zeros((B_pad, F_pad), x.dtype).at[:B, :F].set(x)
    wp = jnp.zeros((1, F_pad), jnp.float32).at[:, :F].set(weight.astype(jnp.float32))
    b = bias.reshape(1, 1).astype(jnp.float32)

    out = pl.pallas_call(
        logreg_kernel,
        out_shape=jax.ShapeDtypeStruct((B_pad, 1), x.dtype),
        grid=(B_pad // tb,),
        in_specs=[
            pl.BlockSpec((tb, F_pad), lambda i: (i, 0)),   # streamed x tiles
            pl.BlockSpec((1, F_pad), lambda i: (0, 0)),    # tiny weight, reused every step
            pl.BlockSpec(memory_space=pltpu.SMEM),         # scalar bias
        ],
        out_specs=pl.BlockSpec((tb, 1), lambda i: (i, 0)),
        compiler_params=pltpu.CompilerParams(
            dimension_semantics=("parallel",),   # shards batch tiles across v7x's 2 TCs
            vmem_limit_bytes=vmem_limit_bytes,   # explicit scoped limit (v5e default is ~16 MiB)
        ),
    )(xp, wp, b)
    return out[:B]


if __name__ == "__main__":
    num_features = 32
    batch = 8

    key = jax.random.PRNGKey(0)
    kx, kw, kb = jax.random.split(key, 3)

    # Deterministic parameter init (shapes match nn.Linear(num_features, 1, bias=True))
    bound = 1.0 / jnp.sqrt(num_features)
    weight = jax.random.uniform(kw, (1, num_features), jnp.float32, -bound, bound)
    bias = jax.random.uniform(kb, (1,), jnp.float32, -bound, bound)
    x = jax.random.normal(kx, (batch, num_features), jnp.float32)

    out = logistic_regression(x, weight, bias)
    jax.block_until_ready(out)
    ref = jax.nn.sigmoid(x @ weight.T + bias)
    assert out.shape == (batch, 1)
    assert jnp.allclose(out, ref, atol=1e-5, rtol=1e-5)

    # Exercise the tiled / padded path: multiple grid steps, F not a multiple of 128.
    kx2, kw2 = jax.random.split(kx)
    B2, F2 = 4096, 300
    x2 = jax.random.normal(kx2, (B2, F2), jnp.float32)
    w2 = jax.random.uniform(kw2, (1, F2), jnp.float32, -0.1, 0.1)
    out2 = logistic_regression(x2, w2, bias)
    jax.block_until_ready(out2)
    ref2 = jax.nn.sigmoid(x2 @ w2.T + bias)
    assert out2.shape == (B2, 1)
    assert jnp.allclose(out2, ref2, atol=1e-5, rtol=1e-5)

    print("KERNEL_OK")
</pallas_src>

<mosaic_0001>
module attributes {stable_mosaic.version = 11 : i64} {
  func.func @logreg_kernel(%arg0: i32, %arg1: memref<8x128xf32, #tpu.memory_space<vmem>>, %arg2: memref<1x128xf32, #tpu.memory_space<vmem>>, %arg3: memref<1x1xf32, #tpu.memory_space<smem>>, %arg4: memref<8x1xf32, #tpu.memory_space<vmem>>) attributes {dimension_semantics = [#tpu.dimension_semantics<parallel>], iteration_bounds = array<i64: 1>, scalar_prefetch = 0 : i64, scratch_operands = 0 : i64, tpu.core_type = #tpu.core_type<tc>, window_params = [{transform_indices = @transform_0, window_bounds = array<i64: 8, 128>}, {pipeline_mode = #tpu.pipeline_mode<synchronous>, transform_indices = @transform_1, window_bounds = array<i64: 1, 128>}, {transform_indices = @transform_2, window_bounds = array<i64: 1, 1>}, {transform_indices = @transform_3, window_bounds = array<i64: 8, 1>}]} {
    %c0 = arith.constant 0 : index
    %c0_0 = arith.constant 0 : index
    %0 = vector.load %arg1[%c0, %c0_0] : memref<8x128xf32, #tpu.memory_space<vmem>>, vector<8x128xf32>
    %c0_1 = arith.constant 0 : index
    %c0_2 = arith.constant 0 : index
    %1 = vector.load %arg2[%c0_1, %c0_2] : memref<1x128xf32, #tpu.memory_space<vmem>>, vector<1x128xf32>
    %2 = vector.broadcast %1 : vector<1x128xf32> to vector<8x128xf32>
    %3 = arith.mulf %0, %2 : vector<8x128xf32>
    %cst = arith.constant dense<0.000000e+00> : vector<8xf32>
    %4 = vector.multi_reduction <add>, %3, %cst [1] : vector<8x128xf32> to vector<8xf32>
    %5 = vector.shape_cast %4 : vector<8xf32> to vector<8x1xf32>
    %c0_3 = arith.constant 0 : index
    %c0_4 = arith.constant 0 : index
    %6 = memref.load %arg3[%c0_3, %c0_4] : memref<1x1xf32, #tpu.memory_space<smem>>
    %7 = vector.broadcast %6 : f32 to vector<8x1xf32>
    %8 = arith.addf %5, %7 : vector<8x1xf32>
    %9 = arith.negf %8 : vector<8x1xf32>
    %10 = math.exp %9 : vector<8x1xf32>
    %cst_5 = arith.constant 1.000000e+00 : f32
    %11 = vector.broadcast %cst_5 : f32 to vector<8x1xf32>
    %12 = arith.addf %11, %10 : vector<8x1xf32>
    %13 = arith.divf %11, %12 : vector<8x1xf32>
    %c0_6 = arith.constant 0 : index
    %c0_7 = arith.constant 0 : index
    %14 = vector.load %arg4[%c0_6, %c0_7] : memref<8x1xf32, #tpu.memory_space<vmem>>, vector<8x1xf32>
    tpu.vector_store %arg4[%c0_6, %c0_7], %13 {strides = array<i32>} : memref<8x1xf32, #tpu.memory_space<vmem>>, vector<8x1xf32>,
    return
  }
  func.func @transform_0(%arg0: i32) -> (i32, i32) {
    %c0_i32 = arith.constant 0 : i32
    %c0_i32_0 = arith.constant 0 : i32
    return %arg0, %c0_i32 : i32, i32
  }
  func.func @transform_1(%arg0: i32) -> (i32, i32) {
    %c0_i32 = arith.constant 0 : i32
    %c0_i32_0 = arith.constant 0 : i32
    %c0_i32_1 = arith.constant 0 : i32
    return %c0_i32, %c0_i32_0 : i32, i32
  }
  func.func @transform_2(%arg0: i32) -> (i32, i32) {
    %c0_i32 = arith.constant 0 : i32
    %c0_i32_0 = arith.constant 0 : i32
    %c0_i32_1 = arith.constant 0 : i32
    return %c0_i32, %c0_i32_0 : i32, i32
  }
  func.func @transform_3(%arg0: i32) -> (i32, i32) {
    %c0_i32 = arith.constant 0 : i32
    %c0_i32_0 = arith.constant 0 : i32
    return %arg0, %c0_i32 : i32, i32
  }
}

</mosaic_0001>

<llo_original>
// kernel: tpu_custom_call.1
$region0: #{tpu_custom_call.1}
  #allocation0 [shape = 'u32[]', space=smem, size = 0x4, offset = 0x4, fixed_abs, tag = 'smem constant byte address 0x4 - core index']
  #allocation1 [shape = 'u32[144,128]{1,0:T(1,128)}', space=vmem, size = 0x12000, scoped, tag = 'internal scratch']
  #allocation2 [shape = 'f32[1,1]{1,0:T(1,128)S(6)}', space=smem, size = 0x200, scoped, tag = 'scoped memory for tpu_custom_call.1']
  %s0 = inlined_call_operand.hbm [shape: f32[8,128], index: 0, kind: input, shape index: {}]
  %s1 = inlined_call_operand.vmem [shape: f32[1,128], index: 1, kind: input, shape index: {}]
  %s2 = inlined_call_operand.<no memory space> [shape: f32[1,1], index: 2, kind: input, shape index: {}]
  %s3 = inlined_call_operand.vmem [shape: f32[8,1], index: 3, kind: output, shape index: {}]
  %s4 = sld [smem:[#allocation0]]
  $region26: #{tpu_custom_call.1} parent=0
    _
  %s6 = ssub.s32 1, %s4
  %s7 = scalar_select 0, %s6, %s4
  %8 = sst [smem:[#allocation2]] %s2
  $region1: #{tpu_custom_call.1} parent=0
    #allocation3 [shape = 'u8[4096]{0}', space=vmem, size = 0x1000, scoped, tag = 'input window, operand 0, single buffered']
    #allocation4 [shape = 's32[1]{0}', space=sflag, size = 0x4, scoped, tag = 'scoped memory for tpu_custom_call.1']
    %9 = vsyncpa [#allocation4], 0
    // Predicated region
    $region2: #{tpu_custom_call.1} parent=1 // pred_check
      _
    $region3: #{tpu_custom_call.1} parent=1 // pred_check_branch
      %11 = sbr.rel (0) target = $region5
    $region4: #{tpu_custom_call.1} parent=1 // pred_region
      %s13 = ssub.s32 128, 128
      %14 = vsyncadd [#allocation4], %s13
      %s16 = sshll.u32 [#allocation3], 4
      %s17 = int_to_ptr.vmem [resolvable:$true] %s16
      %19 = dma.hbm_to_vmem [thread:$0]  %s0, 128, %s17, [#allocation4]
    $region5: #{tpu_custom_call.1} parent=1 // pred_fallthru
      _
    // Predicated region
    $region6: #{tpu_custom_call.1} parent=1 // pred_check
      _
    $region7: #{tpu_custom_call.1} parent=1 // pred_check_branch
      %21 = sbr.rel (0) target = $region9
    $region8: #{tpu_custom_call.1} parent=1 // pred_region
      _
    $region9: #{tpu_custom_call.1} parent=1 // pred_fallthru
      _
    // Predicated region
    $region10: #{tpu_custom_call.1} parent=1 // pred_check
      _
    $region11: #{tpu_custom_call.1} parent=1 // pred_check_branch
      %23 = sbr.rel (0) target = $region13
    $region12: #{tpu_custom_call.1} parent=1 // pred_region
      _
    $region13: #{tpu_custom_call.1} parent=1 // pred_fallthru
      _
    // Predicated region
    $region14: #{tpu_custom_call.1} parent=1 // pred_check
      _
    $region15: #{tpu_custom_call.1} parent=1 // pred_check_branch
      %25 = sbr.rel (0) target = $region17
    $region16: #{tpu_custom_call.1} parent=1 // pred_region
      %26 = dma.done [#allocation4], 128
    $region17: #{tpu_custom_call.1} parent=1 // pred_fallthru
      _
    %v27 = vld [vmem:[#allocation3] sm:$0xff]
    %v28 = vld [vmem:[%s1] sm:$0x1]
    %v30 = vlaneseq
    %v31 = vshrl.u32 %v30, 7
    %v32 = vsub.s32 0, %v31
    %v33 = vrot.slane %v28, %v32
    %v35 = vmul.f32 %v27, %v33
    %36 = vadd.xlane.f32.xlu0 %v35
    %v37 = vpop.xlane.xlu0 %36
    %s38 = sld [smem:[#allocation2]]
    %v39 = vstv %s38
    %v40 = vadd.f32 %v37, %v39
    %v41 = vxor.u32 %v40, 2147483648
    %v42 = vmul.f32 %v41, 1.442695
    %v43 = vpow.pop %v42
    %v44 = vadd.f32 %v43, 1.0
    %v45 = vrcp.pop %v44
    %v46 = vmul.f32 1.0, %v45
    %vm47 = vcmask 7168
    %48 = vst.msk [vmem:[%s3] sm:$0xff] %vm47, %v46
    // Predicated region
    $region18: #{tpu_custom_call.1} parent=1 // pred_check
      _
    $region19: #{tpu_custom_call.1} parent=1 // pred_check_branch
      %50 = sbr.rel (0) target = $region21
    $region20: #{tpu_custom_call.1} parent=1 // pred_region
      _
    $region21: #{tpu_custom_call.1} parent=1 // pred_fallthru
      _
    // Predicated region
    $region22: #{tpu_custom_call.1} parent=1 // pred_check
      _
    $region23: #{tpu_custom_call.1} parent=1 // pred_check_branch
      %52 = sbr.rel (0) target = $region25
    $region24: #{tpu_custom_call.1} parent=1 // pred_region
      _
    $region25: #{tpu_custom_call.1} parent=1 // pred_fallthru
      _
    %53 = vsyncpa [#allocation4], 1

</llo_original>
